<compile_context>
chip_gen: v6e
topology: v6e:2x2x1
jax: 0.10.0
libtpu: 0.0.40
codegen_flags: <defaults>
</compile_context>

<pallas_src>
import jax
import jax.numpy as jnp
from jax.experimental import pallas as pl
from jax.experimental.pallas import tpu as pltpu

# ---- small, deterministic config (mirrors the nn.Module __init__ shapes) ----
N_VOCAB = 32          # config.n_vocab
EMBED = 32            # config.embed
SEQ_LEN = 16          # sequence length of x[0]
NUM_FILTERS = 8       # config.num_filters
FILTER_SIZES = (2, 3, 4)   # config.filter_sizes
NUM_CLASSES = 4       # config.num_classes
BATCH = 2

FEAT_DIM = NUM_FILTERS * len(FILTER_SIZES)      # 24
CONV_COLS = sum(FILTER_SIZES) * NUM_FILTERS     # 72 used columns
CONV_COLS_PAD = 128                             # lane-dense padded width


# ----------------------------- Pallas kernel --------------------------------
def textcnn_kernel(ids_ref, emb_ref, wconv_ref, bconv_ref, wfc_ref, bfc_ref,
                   out_ref):
    # ids_ref   : (B*S, 1) int32        flattened token ids
    # emb_ref   : (V, E)   f32          embedding table (padding row is zero)
    # wconv_ref : (E, 128) f32          packed conv weights (tap-major columns)
    # bconv_ref : (1, 3F)  f32          packed conv biases
    # wfc_ref   : (3F, C)  f32          fc weight (already transposed)
    # bfc_ref   : (1, C)   f32          fc bias
    # out_ref   : (B, C)   f32          logits
    BS = ids_ref.shape[0]
    B = BS // SEQ_LEN
    V = emb_ref.shape[0]
    F = NUM_FILTERS

    # --- fused embedding lookup: one-hot (BS, V) @ (V, E) on the MXU --------
    ids = ids_ref[...]                                              # (BS, 1)
    vocab_iota = jax.lax.broadcasted_iota(jnp.int32, (BS, V), 1)
    onehot = (ids == vocab_iota).astype(jnp.float32)                # (BS, V)
    emb = jnp.dot(onehot, emb_ref[...],
                  preferred_element_type=jnp.float32)               # (BS, E)

    # --- one wide, lane-dense conv matmul: all taps of all filter sizes -----
    z = jnp.dot(emb, wconv_ref[...],
                preferred_element_type=jnp.float32)                 # (BS, 128)
    z = z.reshape(B, SEQ_LEN, CONV_COLS_PAD)                        # (B, S, 128)

    # --- per-filter: sum static shifted tap slices, max-pool over sequence --
    pooled = []
    off = 0
    for k in FILTER_SIZES:
        L = SEQ_LEN - k + 1                      # valid window starts only
        acc = z[:, 0:L, off:off + F]             # tap j = 0
        for j in range(1, k):
            acc = acc + z[:, j:j + L, off + j * F: off + (j + 1) * F]
        pooled.append(jnp.max(acc, axis=1))      # (B, F) max over sequence
        off += k * F

    feat = jnp.concatenate(pooled, axis=1)                          # (B, 3F)
    # conv bias + ReLU commute with the per-channel max; dropout = identity
    feat = jnp.maximum(feat + bconv_ref[...], 0.0)

    logits = jnp.dot(feat, wfc_ref[...],
                     preferred_element_type=jnp.float32) + bfc_ref[...]
    out_ref[...] = logits.astype(out_ref.dtype)


# ------------------------------ wrapper --------------------------------------
def textcnn_forward(token_ids, packed):
    B, S = token_ids.shape
    ids = token_ids.reshape(B * S, 1).astype(jnp.int32)

    # Single batch tile at this toy size; shrink the row tile (multiple batches
    # per program) once B grows, so the "parallel" axis shards across v7x TCs.
    grid = (1,)

    return pl.pallas_call(
        textcnn_kernel,
        out_shape=jax.ShapeDtypeStruct((B, NUM_CLASSES), jnp.float32),
        grid=grid,
        in_specs=[
            pl.BlockSpec((B * S, 1), lambda i: (i, 0)),
            pl.BlockSpec(packed["embedding"].shape, lambda i: (0, 0)),
            pl.BlockSpec(packed["wconv"].shape, lambda i: (0, 0)),
            pl.BlockSpec(packed["bconv"].shape, lambda i: (0, 0)),
            pl.BlockSpec(packed["wfc"].shape, lambda i: (0, 0)),
            pl.BlockSpec(packed["bfc"].shape, lambda i: (0, 0)),
        ],
        out_specs=pl.BlockSpec((B, NUM_CLASSES), lambda i: (i, 0)),
        compiler_params=pltpu.CompilerParams(
            dimension_semantics=("parallel",)),
    )(ids, packed["embedding"], packed["wconv"], packed["bconv"],
      packed["wfc"], packed["bfc"])


textcnn_forward_jit = jax.jit(textcnn_forward)


# --------------------------- parameter init ----------------------------------
def init_params(key):
    """Parameters in PyTorch layouts (used by the pure-JAX reference)."""
    ks = jax.random.split(key, 16)
    embedding = 0.1 * jax.random.normal(ks[0], (N_VOCAB, EMBED), jnp.float32)
    embedding = embedding.at[N_VOCAB - 1].set(0.0)   # padding_idx row zeroed

    convs = []
    for i, k in enumerate(FILTER_SIZES):
        fan_in = 1 * k * EMBED
        bound = float(1.0 / (fan_in ** 0.5))
        # PyTorch Conv2d weight layout: (F, 1, k, E)
        w = jax.random.uniform(ks[1 + 2 * i], (NUM_FILTERS, 1, k, EMBED),
                               jnp.float32, -bound, bound)
        b = jax.random.uniform(ks[2 + 2 * i], (NUM_FILTERS,),
                               jnp.float32, -bound, bound)
        convs.append((w, b))

    bound = float(1.0 / (FEAT_DIM ** 0.5))
    # PyTorch Linear weight layout: (C, 3F)
    wfc = jax.random.uniform(ks[8], (NUM_CLASSES, FEAT_DIM),
                             jnp.float32, -bound, bound)
    bfc = jax.random.uniform(ks[9], (NUM_CLASSES,),
                             jnp.float32, -bound, bound)
    return {"embedding": embedding, "convs": convs, "wfc": wfc, "bfc": bfc}


def pack_params(params):
    """All weight layout prep host-side: one lane-padded conv weight/bias."""
    F = NUM_FILTERS
    wconv = jnp.zeros((EMBED, CONV_COLS_PAD), jnp.float32)
    biases = []
    off = 0
    for (w, b), k in zip(params["convs"], FILTER_SIZES):
        for j in range(k):
            # w[:, 0, j, :] is (F, E) -> (E, F) column block for tap j
            wconv = wconv.at[:, off + j * F: off + (j + 1) * F].set(
                w[:, 0, j, :].T)
        biases.append(b)
        off += k * F
    bconv = jnp.concatenate(biases).reshape(1, FEAT_DIM)
    return {
        "embedding": params["embedding"].astype(jnp.float32),
        "wconv": wconv,
        "bconv": bconv,
        "wfc": params["wfc"].T.astype(jnp.float32),             # (3F, C)
        "bfc": params["bfc"].reshape(1, NUM_CLASSES).astype(jnp.float32),
    }


# --------------------------- pure-JAX reference -------------------------------
def reference_forward(token_ids, params):
    emb = jnp.take(params["embedding"], token_ids, axis=0)      # (B, S, E)
    feats = []
    for (w, b) in params["convs"]:                               # w: (F,1,k,E)
        k = w.shape[2]
        L = SEQ_LEN - k + 1
        win = jnp.stack([emb[:, j:j + L, :] for j in range(k)], axis=2)
        scores = jnp.einsum("blke,fke->blf", win, w[:, 0]) + b   # (B, L, F)
        feats.append(jnp.max(jax.nn.relu(scores), axis=1))       # (B, F)
    feat = jnp.concatenate(feats, axis=1)                        # (B, 3F)
    return feat @ params["wfc"].T + params["bfc"]


# --------------------------------- main ---------------------------------------
if __name__ == "__main__":
    key = jax.random.PRNGKey(0)
    pkey, dkey = jax.random.split(key)
    params = init_params(pkey)
    packed = pack_params(params)
    token_ids = jax.random.randint(dkey, (BATCH, SEQ_LEN), 0, N_VOCAB,
                                   dtype=jnp.int32)

    out = textcnn_forward_jit(token_ids, packed)
    out = jax.block_until_ready(out)

    ref = reference_forward(token_ids, params)
    assert out.shape == (BATCH, NUM_CLASSES), out.shape
    assert jnp.allclose(out, ref, atol=1e-4, rtol=1e-4), (out, ref)

    print("KERNEL_OK")
</pallas_src>

<mosaic_0001>
module attributes {stable_mosaic.version = 11 : i64} {
  func.func @textcnn_kernel(%arg0: i32, %arg1: memref<32x1xi32, #tpu.memory_space<vmem>>, %arg2: memref<32x32xf32, #tpu.memory_space<vmem>>, %arg3: memref<32x128xf32, #tpu.memory_space<vmem>>, %arg4: memref<1x24xf32, #tpu.memory_space<vmem>>, %arg5: memref<24x4xf32, #tpu.memory_space<vmem>>, %arg6: memref<1x4xf32, #tpu.memory_space<vmem>>, %arg7: memref<2x4xf32, #tpu.memory_space<vmem>>) attributes {dimension_semantics = [#tpu.dimension_semantics<parallel>], iteration_bounds = array<i64: 1>, scalar_prefetch = 0 : i64, scratch_operands = 0 : i64, tpu.core_type = #tpu.core_type<tc>, window_params = [{transform_indices = @transform_0, window_bounds = array<i64: 32, 1>}, {pipeline_mode = #tpu.pipeline_mode<synchronous>, transform_indices = @transform_1, window_bounds = array<i64: 32, 32>}, {pipeline_mode = #tpu.pipeline_mode<synchronous>, transform_indices = @transform_2, window_bounds = array<i64: 32, 128>}, {pipeline_mode = #tpu.pipeline_mode<synchronous>, transform_indices = @transform_3, window_bounds = array<i64: 1, 24>}, {pipeline_mode = #tpu.pipeline_mode<synchronous>, transform_indices = @transform_4, window_bounds = array<i64: 24, 4>}, {pipeline_mode = #tpu.pipeline_mode<synchronous>, transform_indices = @transform_5, window_bounds = array<i64: 1, 4>}, {transform_indices = @transform_6, window_bounds = array<i64: 2, 4>}]} {
    %c0 = arith.constant 0 : index
    %c0_0 = arith.constant 0 : index
    %0 = vector.load %arg1[%c0, %c0_0] : memref<32x1xi32, #tpu.memory_space<vmem>>, vector<32x1xi32>
    %1 = tpu.iota {dimensions = array<i32: 1>} : vector<32x32xi32>
    %2 = vector.broadcast %0 : vector<32x1xi32> to vector<32x32xi32>
    %3 = arith.cmpi eq, %2, %1 : vector<32x32xi32>
    %4 = arith.extui %3 : vector<32x32xi1> to vector<32x32xi32>
    %5 = arith.sitofp %4 : vector<32x32xi32> to vector<32x32xf32>
    %c0_1 = arith.constant 0 : index
    %c0_2 = arith.constant 0 : index
    %6 = vector.load %arg2[%c0_1, %c0_2] : memref<32x32xf32, #tpu.memory_space<vmem>>, vector<32x32xf32>
    %cst = arith.constant dense<0.000000e+00> : vector<32x32xf32>
    %7 = tpu.matmul %5, %6, %cst {dimension_numbers = #tpu.dot_dimension_numbers<[1], [0], [0], [1], [0, 0, 1, 1], [], []>} : vector<32x32xf32>, vector<32x32xf32>, vector<32x32xf32> -> vector<32x32xf32>
    %c0_3 = arith.constant 0 : index
    %c0_4 = arith.constant 0 : index
    %8 = vector.load %arg3[%c0_3, %c0_4] : memref<32x128xf32, #tpu.memory_space<vmem>>, vector<32x128xf32>
    %cst_5 = arith.constant dense<0.000000e+00> : vector<32x128xf32>
    %9 = tpu.matmul %7, %8, %cst_5 {dimension_numbers = #tpu.dot_dimension_numbers<[1], [0], [0], [1], [0, 0, 1, 1], [], []>} : vector<32x32xf32>, vector<32x128xf32>, vector<32x128xf32> -> vector<32x128xf32>
    %10 = vector.shape_cast %9 : vector<32x128xf32> to vector<2x16x128xf32>
    %11 = vector.extract_strided_slice %10 {offsets = [0, 0, 0], sizes = [2, 15, 8], strides = [1, 1, 1]} : vector<2x16x128xf32> to vector<2x15x8xf32>
    %12 = vector.extract_strided_slice %10 {offsets = [0, 1, 8], sizes = [2, 15, 8], strides = [1, 1, 1]} : vector<2x16x128xf32> to vector<2x15x8xf32>
    %13 = arith.addf %11, %12 : vector<2x15x8xf32>
    %cst_6 = arith.constant dense<0xFF800000> : vector<2x8xf32>
    %14 = vector.multi_reduction <maximumf>, %13, %cst_6 [1] : vector<2x15x8xf32> to vector<2x8xf32>
    %15 = vector.extract_strided_slice %10 {offsets = [0, 0, 16], sizes = [2, 14, 8], strides = [1, 1, 1]} : vector<2x16x128xf32> to vector<2x14x8xf32>
    %16 = vector.extract_strided_slice %10 {offsets = [0, 1, 24], sizes = [2, 14, 8], strides = [1, 1, 1]} : vector<2x16x128xf32> to vector<2x14x8xf32>
    %17 = arith.addf %15, %16 : vector<2x14x8xf32>
    %18 = vector.extract_strided_slice %10 {offsets = [0, 2, 32], sizes = [2, 14, 8], strides = [1, 1, 1]} : vector<2x16x128xf32> to vector<2x14x8xf32>
    %19 = arith.addf %17, %18 : vector<2x14x8xf32>
    %cst_7 = arith.constant dense<0xFF800000> : vector<2x8xf32>
    %20 = vector.multi_reduction <maximumf>, %19, %cst_7 [1] : vector<2x14x8xf32> to vector<2x8xf32>
    %21 = vector.extract_strided_slice %10 {offsets = [0, 0, 40], sizes = [2, 13, 8], strides = [1, 1, 1]} : vector<2x16x128xf32> to vector<2x13x8xf32>
    %22 = vector.extract_strided_slice %10 {offsets = [0, 1, 48], sizes = [2, 13, 8], strides = [1, 1, 1]} : vector<2x16x128xf32> to vector<2x13x8xf32>
    %23 = arith.addf %21, %22 : vector<2x13x8xf32>
    %24 = vector.extract_strided_slice %10 {offsets = [0, 2, 56], sizes = [2, 13, 8], strides = [1, 1, 1]} : vector<2x16x128xf32> to vector<2x13x8xf32>
    %25 = arith.addf %23, %24 : vector<2x13x8xf32>
    %26 = vector.extract_strided_slice %10 {offsets = [0, 3, 64], sizes = [2, 13, 8], strides = [1, 1, 1]} : vector<2x16x128xf32> to vector<2x13x8xf32>
    %27 = arith.addf %25, %26 : vector<2x13x8xf32>
    %cst_8 = arith.constant dense<0xFF800000> : vector<2x8xf32>
    %28 = vector.multi_reduction <maximumf>, %27, %cst_8 [1] : vector<2x13x8xf32> to vector<2x8xf32>
    %29 = tpu.concatenate %14, %20, %28 in 1 : vector<2x8xf32>, vector<2x8xf32>, vector<2x8xf32> -> vector<2x24xf32>
    %c0_9 = arith.constant 0 : index
    %c0_10 = arith.constant 0 : index
    %30 = vector.load %arg4[%c0_9, %c0_10] : memref<1x24xf32, #tpu.memory_space<vmem>>, vector<1x24xf32>
    %31 = vector.broadcast %30 : vector<1x24xf32> to vector<2x24xf32>
    %32 = arith.addf %29, %31 : vector<2x24xf32>
    %cst_11 = arith.constant 0.000000e+00 : f32
    %33 = vector.broadcast %cst_11 : f32 to vector<2x24xf32>
    %34 = arith.maximumf %32, %33 : vector<2x24xf32>
    %c0_12 = arith.constant 0 : index
    %c0_13 = arith.constant 0 : index
    %35 = vector.load %arg5[%c0_12, %c0_13] : memref<24x4xf32, #tpu.memory_space<vmem>>, vector<24x4xf32>
    %cst_14 = arith.constant dense<0.000000e+00> : vector<2x4xf32>
    %36 = tpu.matmul %34, %35, %cst_14 {dimension_numbers = #tpu.dot_dimension_numbers<[1], [0], [0], [1], [0, 0, 1, 1], [], []>} : vector<2x24xf32>, vector<24x4xf32>, vector<2x4xf32> -> vector<2x4xf32>
    %c0_15 = arith.constant 0 : index
    %c0_16 = arith.constant 0 : index
    %37 = vector.load %arg6[%c0_15, %c0_16] : memref<1x4xf32, #tpu.memory_space<vmem>>, vector<1x4xf32>
    %38 = vector.broadcast %37 : vector<1x4xf32> to vector<2x4xf32>
    %39 = arith.addf %36, %38 : vector<2x4xf32>
    %c0_17 = arith.constant 0 : index
    %c0_18 = arith.constant 0 : index
    %40 = vector.load %arg7[%c0_17, %c0_18] : memref<2x4xf32, #tpu.memory_space<vmem>>, vector<2x4xf32>
    tpu.vector_store %arg7[%c0_17, %c0_18], %39 {strides = array<i32>} : memref<2x4xf32, #tpu.memory_space<vmem>>, vector<2x4xf32>,
    return
  }
  func.func @transform_0(%arg0: i32) -> (i32, i32) {
    %c0_i32 = arith.constant 0 : i32
    %c0_i32_0 = arith.constant 0 : i32
    return %arg0, %c0_i32 : i32, i32
  }
  func.func @transform_1(%arg0: i32) -> (i32, i32) {
    %c0_i32 = arith.constant 0 : i32
    %c0_i32_0 = arith.constant 0 : i32
    %c0_i32_1 = arith.constant 0 : i32
    return %c0_i32, %c0_i32_0 : i32, i32
  }
  func.func @transform_2(%arg0: i32) -> (i32, i32) {
    %c0_i32 = arith.constant 0 : i32
    %c0_i32_0 = arith.constant 0 : i32
    %c0_i32_1 = arith.constant 0 : i32
    return %c0_i32, %c0_i32_0 : i32, i32
  }
  func.func @transform_3(%arg0: i32) -> (i32, i32) {
    %c0_i32 = arith.constant 0 : i32
    %c0_i32_0 = arith.constant 0 : i32
    %c0_i32_1 = arith.constant 0 : i32
    return %c0_i32, %c0_i32_0 : i32, i32
  }
  func.func @transform_4(%arg0: i32) -> (i32, i32) {
    %c0_i32 = arith.constant 0 : i32
    %c0_i32_0 = arith.constant 0 : i32
    %c0_i32_1 = arith.constant 0 : i32
    return %c0_i32, %c0_i32_0 : i32, i32
  }
  func.func @transform_5(%arg0: i32) -> (i32, i32) {
    %c0_i32 = arith.constant 0 : i32
    %c0_i32_0 = arith.constant 0 : i32
    %c0_i32_1 = arith.constant 0 : i32
    return %c0_i32, %c0_i32_0 : i32, i32
  }
  func.func @transform_6(%arg0: i32) -> (i32, i32) {
    %c0_i32 = arith.constant 0 : i32
    %c0_i32_0 = arith.constant 0 : i32
    return %arg0, %c0_i32 : i32, i32
  }
}

</mosaic_0001>

<llo_original>
// kernel: textcnn_forward.1
$region0: #{textcnn_forward.1}
  #allocation0 [shape = 'u32[]', space=smem, size = 0x4, offset = 0x4, fixed_abs, tag = 'smem constant byte address 0x4 - core index']
  #allocation1 [shape = 'u32[144,128]{1,0:T(1,128)}', space=vmem, size = 0x12000, scoped, tag = 'internal scratch']
  %s0 = inlined_call_operand.vmem [shape: s32[32,1], index: 0, kind: input, shape index: {}]
  %s1 = inlined_call_operand.vmem [shape: f32[32,32], index: 1, kind: input, shape index: {}]
  %s2 = inlined_call_operand.vmem [shape: f32[32,128], index: 2, kind: input, shape index: {}]
  %s3 = inlined_call_operand.vmem [shape: f32[1,24], index: 3, kind: input, shape index: {}]
  %s4 = inlined_call_operand.vmem [shape: f32[24,4], index: 4, kind: input, shape index: {}]
  %s5 = inlined_call_operand.hbm [shape: f32[1,4], index: 5, kind: input, shape index: {}]
  %s6 = inlined_call_operand.hbm [shape: f32[2,4], index: 6, kind: output, shape index: {}]
  %s7 = sld [smem:[#allocation0]]
  $region38: #{textcnn_forward.1} parent=0
    _
  %s9 = ssub.s32 1, %s7
  %s10 = scalar_select 0, %s9, %s7
  $region1: #{textcnn_forward.1} parent=0
    #allocation2 [shape = 'u8[512]{0}', space=vmem, size = 0x400, scoped, tag = 'input window, operand 5, single buffered']
    #allocation3 [shape = 's32[1]{0}', space=sflag, size = 0x4, scoped, tag = 'scoped memory for textcnn_forward.1']
    #allocation4 [shape = 's32[1]{0}', space=sflag, size = 0x4, scoped, tag = 'scoped memory for textcnn_forward.1']
    #allocation5 [shape = 'u8[1024]{0}', space=vmem, size = 0x400, scoped, tag = 'output window, operand 0, single buffered']
    %11 = vsyncpa [#allocation3], 0
    %12 = vsyncpa [#allocation4], 0
    // Predicated region
    $region2: #{textcnn_forward.1} parent=1 // pred_check
      _
    $region3: #{textcnn_forward.1} parent=1 // pred_check_branch
      %14 = sbr.rel (0) target = $region5
    $region4: #{textcnn_forward.1} parent=1 // pred_region
      _
    $region5: #{textcnn_forward.1} parent=1 // pred_fallthru
      _
    // Predicated region
    $region6: #{textcnn_forward.1} parent=1 // pred_check
      _
    $region7: #{textcnn_forward.1} parent=1 // pred_check_branch
      %16 = sbr.rel (0) target = $region9
    $region8: #{textcnn_forward.1} parent=1 // pred_region
      _
    $region9: #{textcnn_forward.1} parent=1 // pred_fallthru
      _
    // Predicated region
    $region10: #{textcnn_forward.1} parent=1 // pred_check
      _
    $region11: #{textcnn_forward.1} parent=1 // pred_check_branch
      %18 = sbr.rel (0) target = $region13
    $region12: #{textcnn_forward.1} parent=1 // pred_region
      _
    $region13: #{textcnn_forward.1} parent=1 // pred_fallthru
      _
    // Predicated region
    $region14: #{textcnn_forward.1} parent=1 // pred_check
      _
    $region15: #{textcnn_forward.1} parent=1 // pred_check_branch
      %20 = sbr.rel (0) target = $region17
    $region16: #{textcnn_forward.1} parent=1 // pred_region
      _
    $region17: #{textcnn_forward.1} parent=1 // pred_fallthru
      _
    // Predicated region
    $region18: #{textcnn_forward.1} parent=1 // pred_check
      _
    $region19: #{textcnn_forward.1} parent=1 // pred_check_branch
      %22 = sbr.rel (0) target = $region21
    $region20: #{textcnn_forward.1} parent=1 // pred_region
      _
    $region21: #{textcnn_forward.1} parent=1 // pred_fallthru
      _
    // Predicated region
    $region22: #{textcnn_forward.1} parent=1 // pred_check
      _
    $region23: #{textcnn_forward.1} parent=1 // pred_check_branch
      %24 = sbr.rel (0) target = $region25
    $region24: #{textcnn_forward.1} parent=1 // pred_region
      %s26 = ssub.s32 16, 16
      %27 = vsyncadd [#allocation3], %s26
      %s29 = sshll.u32 [#allocation2], 4
      %s30 = int_to_ptr.vmem [resolvable:$true] %s29
      %32 = dma.hbm_to_vmem [thread:$0]  %s5, 16, %s30, [#allocation3]
    $region25: #{textcnn_forward.1} parent=1 // pred_fallthru
      _
    // Predicated region
    $region26: #{textcnn_forward.1} parent=1 // pred_check
      _
    $region27: #{textcnn_forward.1} parent=1 // pred_check_branch
      %34 = sbr.rel (0) target = $region29
    $region28: #{textcnn_forward.1} parent=1 // pred_region
      %35 = dma.done [#allocation3], 16
    $region29: #{textcnn_forward.1} parent=1 // pred_fallthru
      _
    %v36 = vld [vmem:[%s0] sm:$0xff]
    %v37 = vld [vmem:[%s0 + $0x8] sm:$0xff]
    %v38 = vld [vmem:[%s0 + $0x10] sm:$0xff]
    %v39 = vld [vmem:[%s0 + $0x18] sm:$0xff]
    %v40 = vlaneseq
    %v41 = vand.u32 %v40, 127
    %42 = vset.pattern.permute.xlu0 0
    %43 = vperm.xlu0 %42, %v36
    %v44 = vpop.permute.xlu0 %43
    %45 = vset.pattern.permute.xlu0 0
    %46 = vperm.xlu0 %45, %v37
    %v47 = vpop.permute.xlu0 %46
    %48 = vset.pattern.permute.xlu0 0
    %49 = vperm.xlu0 %48, %v38
    %v50 = vpop.permute.xlu0 %49
    %51 = vset.pattern.permute.xlu0 0
    %52 = vperm.xlu0 %51, %v39
    %v53 = vpop.permute.xlu0 %52
    %vm54 = vcmp.eq.s32.totalorder %v44, %v41
    %vm55 = vcmp.eq.s32.totalorder %v47, %v41
    %vm56 = vcmp.eq.s32.totalorder %v50, %v41
    %vm57 = vcmp.eq.s32.totalorder %v53, %v41
    %v58 = vsel %vm54, 1, 0
    %v59 = vsel %vm55, 1, 0
    %v60 = vsel %vm56, 1, 0
    %v61 = vsel %vm57, 1, 0
    %v62 = vcvt.s32.f32 %v58
    %v63 = vcvt.s32.f32 %v59
    %v64 = vcvt.s32.f32 %v60
    %v65 = vcvt.s32.f32 %v61
    %v66 = vld [vmem:[%s1] sm:$0xff]
    %v67 = vld [vmem:[%s1 + $0x8] sm:$0xff]
    %v68 = vld [vmem:[%s1 + $0x10] sm:$0xff]
    %v69 = vld [vmem:[%s1 + $0x18] sm:$0xff]
    %vm70 = vcmask 261120
    %v72 = vsel %vm70, %v62, 0
    %v75 = vsel %vm70, %v63, 0
    %v78 = vsel %vm70, %v64, 0
    %v81 = vsel %vm70, %v65, 0
    %83 = vmatprep.subr.mxu0 0.0
    %84 = vmatpush1.msra.mxu0 0.0
    %85 = vmatprep.subr.mxu0 0.0
    %86 = vmatpush1.msra.mxu0 0.0
    %87 = vmatprep.subr.mxu0 0.0
    %88 = vmatpush1.msra.mxu0 0.0
    %89 = vmatprep.subr.mxu0 0.0
    %90 = vmatpush1.msra.mxu0 0.0
    %91 = vmatprep.subr.mxu0 0.0
    %92 = vmatpush1.msra.mxu0 0.0
    %93 = vmatprep.subr.mxu0 0.0
    %94 = vmatpush1.msra.mxu0 0.0
    %95 = vmatprep.subr.mxu0 0.0
    %96 = vmatpush1.msra.mxu0 0.0
    %97 = vmatprep.subr.mxu0 0.0
    %98 = vmatpush1.msra.mxu0 0.0
    %99 = vmatprep.subr.mxu0 0.0
    %100 = vmatpush1.msra.mxu0 0.0
    %101 = vmatprep.subr.mxu0 0.0
    %102 = vmatpush1.msra.mxu0 0.0
    %103 = vmatprep.subr.mxu0 0.0
    %104 = vmatpush1.msra.mxu0 0.0
    %105 = vmatprep.subr.mxu0 0.0
    %106 = vmatpush1.msra.mxu0 0.0
    %107 = vmatprep.subr.mxu0 0.0
    %108 = vmatpush1.msra.mxu0 %v69
    %109 = vmatprep.subr.mxu0 0.0
    %110 = vmatpush1.msra.mxu0 %v68
    %111 = vmatprep.subr.mxu0 0.0
    %112 = vmatpush1.msra.mxu0 %v67
    %113 = vmatprep.subr.mxu0 0.0
    %114 = vmatpush1.msra.mxu0 %v66
    %115 = vmatprep.subr.mxu0 0.0
    %116 = vmatpush2.msra.mxu0 0.0
    %117 = vmatprep.subr.mxu0 0.0
    %118 = vmatpush2.msra.mxu0 0.0
    %119 = vmatprep.subr.mxu0 0.0
    %120 = vmatpush2.msra.mxu0 0.0
    %121 = vmatprep.subr.mxu0 0.0
    %122 = vmatpush2.msra.mxu0 0.0
    %123 = vmatprep.subr.mxu0 0.0
    %124 = vmatpush2.msra.mxu0 0.0
    %125 = vmatprep.subr.mxu0 0.0
    %126 = vmatpush2.msra.mxu0 0.0
    %127 = vmatprep.subr.mxu0 0.0
    %128 = vmatpush2.msra.mxu0 0.0
    %129 = vmatprep.subr.mxu0 0.0
    %130 = vmatpush2.msra.mxu0 0.0
    %131 = vmatprep.subr.mxu0 0.0
    %132 = vmatpush2.msra.mxu0 0.0
    %133 = vmatprep.subr.mxu0 0.0
    %134 = vmatpush2.msra.mxu0 0.0
    %135 = vmatprep.subr.mxu0 0.0
    %136 = vmatpush2.msra.mxu0 0.0
    %137 = vmatprep.subr.mxu0 0.0
    %138 = vmatpush2.msra.mxu0 0.0
    %139 = vmatprep.subr.mxu0 0.0
    %140 = vmatpush2.msra.mxu0 0.0
    %141 = vmatprep.subr.mxu0 0.0
    %142 = vmatpush2.msra.mxu0 0.0
    %143 = vmatprep.subr.mxu0 0.0
    %144 = vmatpush2.msra.mxu0 0.0
    %145 = vmatprep.subr.mxu0 0.0
    %146 = vmatpush2.msra.mxu0 0.0
    %147 = vmatprep.mubr.f32.mxu0 0.0
    %148 = vmatmul.mubr.f32.gmra.mxu0 %v72
    %v149 = vpop.f32.mrf.mxu0
    %v150 = vadd.f32 0.0, %v149
    %v151 = vpop.f32.mrf.mxu0
    %152 = vmatprep.mubr.f32.mxu0 0.0
    %153 = vmatmul.mubr.f32.gmra.mxu0 %v75
    %v154 = vpop.f32.mrf.mxu0
    %v155 = vadd.f32 0.0, %v154
    %v156 = vpop.f32.mrf.mxu0
    %157 = vmatprep.mubr.f32.mxu0 0.0
    %158 = vmatmul.mubr.f32.gmra.mxu0 %v78
    %v159 = vpop.f32.mrf.mxu0
    %v160 = vadd.f32 0.0, %v159
    %v161 = vpop.f32.mrf.mxu0
    %162 = vmatprep.mubr.f32.mxu0 0.0
    %163 = vmatmul.mubr.f32.gmra.mxu0 %v81
    %v164 = vpop.f32.mrf.mxu0
    %v165 = vadd.f32 0.0, %v164
    %v166 = vpop.f32.mrf.mxu0
    %167 = vdwg.mxu0
    %v168 = vld [vmem:[%s2] sm:$0xff]
    %v169 = vld [vmem:[%s2 + $0x8] sm:$0xff]
    %v170 = vld [vmem:[%s2 + $0x10] sm:$0xff]
    %v171 = vld [vmem:[%s2 + $0x18] sm:$0xff]
    %v173 = vsel %vm70, %v150, 0
    %v176 = vsel %vm70, %v155, 0
    %v179 = vsel %vm70, %v160, 0
    %v182 = vsel %vm70, %v165, 0
    %184 = vmatprep.subr.mxu0 0.0
    %185 = vmatpush1.msra.mxu0 0.0
    %186 = vmatprep.subr.mxu0 0.0
    %187 = vmatpush1.msra.mxu0 0.0
    %188 = vmatprep.subr.mxu0 0.0
    %189 = vmatpush1.msra.mxu0 0.0
    %190 = vmatprep.subr.mxu0 0.0
    %191 = vmatpush1.msra.mxu0 0.0
    %192 = vmatprep.subr.mxu0 0.0
    %193 = vmatpush1.msra.mxu0 0.0
    %194 = vmatprep.subr.mxu0 0.0
    %195 = vmatpush1.msra.mxu0 0.0
    %196 = vmatprep.subr.mxu0 0.0
    %197 = vmatpush1.msra.mxu0 0.0
    %198 = vmatprep.subr.mxu0 0.0
    %199 = vmatpush1.msra.mxu0 0.0
    %200 = vmatprep.subr.mxu0 0.0
    %201 = vmatpush1.msra.mxu0 0.0
    %202 = vmatprep.subr.mxu0 0.0
    %203 = vmatpush1.msra.mxu0 0.0
    %204 = vmatprep.subr.mxu0 0.0
    %205 = vmatpush1.msra.mxu0 0.0
    %206 = vmatprep.subr.mxu0 0.0
    %207 = vmatpush1.msra.mxu0 0.0
    %208 = vmatprep.subr.mxu0 0.0
    %209 = vmatpush1.msra.mxu0 %v171
    %210 = vmatprep.subr.mxu0 0.0
    %211 = vmatpush1.msra.mxu0 %v170
    %212 = vmatprep.subr.mxu0 0.0
    %213 = vmatpush1.msra.mxu0 %v169
    %214 = vmatprep.subr.mxu0 0.0
    %215 = vmatpush1.msra.mxu0 %v168
    %216 = vmatprep.subr.mxu0 0.0
    %217 = vmatpush2.msra.mxu0 0.0
    %218 = vmatprep.subr.mxu0 0.0
    %219 = vmatpush2.msra.mxu0 0.0
    %220 = vmatprep.subr.mxu0 0.0
    %221 = vmatpush2.msra.mxu0 0.0
    %222 = vmatprep.subr.mxu0 0.0
    %223 = vmatpush2.msra.mxu0 0.0
    %224 = vmatprep.subr.mxu0 0.0
    %225 = vmatpush2.msra.mxu0 0.0
    %226 = vmatprep.subr.mxu0 0.0
    %227 = vmatpush2.msra.mxu0 0.0
    %228 = vmatprep.subr.mxu0 0.0
    %229 = vmatpush2.msra.mxu0 0.0
    %230 = vmatprep.subr.mxu0 0.0
    %231 = vmatpush2.msra.mxu0 0.0
    %232 = vmatprep.subr.mxu0 0.0
    %233 = vmatpush2.msra.mxu0 0.0
    %234 = vmatprep.subr.mxu0 0.0
    %235 = vmatpush2.msra.mxu0 0.0
    %236 = vmatprep.subr.mxu0 0.0
    %237 = vmatpush2.msra.mxu0 0.0
    %238 = vmatprep.subr.mxu0 0.0
    %239 = vmatpush2.msra.mxu0 0.0
    %240 = vmatprep.subr.mxu0 0.0
    %241 = vmatpush2.msra.mxu0 0.0
    %242 = vmatprep.subr.mxu0 0.0
    %243 = vmatpush2.msra.mxu0 0.0
    %244 = vmatprep.subr.mxu0 0.0
    %245 = vmatpush2.msra.mxu0 0.0
    %246 = vmatprep.subr.mxu0 0.0
    %247 = vmatpush2.msra.mxu0 0.0
    %248 = vmatprep.mubr.f32.mxu0 0.0
    %249 = vmatmul.mubr.f32.gmra.mxu0 %v173
    %v250 = vpop.f32.mrf.mxu0
    %v251 = vadd.f32 0.0, %v250
    %v252 = vpop.f32.mrf.mxu0
    %253 = vmatprep.mubr.f32.mxu0 0.0
    %254 = vmatmul.mubr.f32.gmra.mxu0 %v176
    %v255 = vpop.f32.mrf.mxu0
    %v256 = vadd.f32 0.0, %v255
    %v257 = vpop.f32.mrf.mxu0
    %258 = vmatprep.mubr.f32.mxu0 0.0
    %259 = vmatmul.mubr.f32.gmra.mxu0 %v179
    %v260 = vpop.f32.mrf.mxu0
    %v261 = vadd.f32 0.0, %v260
    %v262 = vpop.f32.mrf.mxu0
    %263 = vmatprep.mubr.f32.mxu0 0.0
    %264 = vmatmul.mubr.f32.gmra.mxu0 %v182
    %v265 = vpop.f32.mrf.mxu0
    %v266 = vadd.f32 0.0, %v265
    %v267 = vpop.f32.mrf.mxu0
    %268 = vdwg.mxu0
    %vm273 = vcmask 1046528
    %v274 = vrot.slane %v251, 1
    %v275 = vrot.slane %v256, 1
    %v276 = vsel %vm273, %v274, %v275
    %v277 = vrot.slane %v261, 1
    %v278 = vrot.slane %v266, 1
    %v279 = vsel %vm273, %v277, %v278
    %280 = vrot.lane.b32.xlu0 %v276, 120
    %v281 = vpop.permute.xlu0 %280
    %282 = vrot.lane.b32.xlu0 %v275, 120
    %v283 = vpop.permute.xlu0 %282
    %284 = vrot.lane.b32.xlu0 %v279, 120
    %v285 = vpop.permute.xlu0 %284
    %286 = vrot.lane.b32.xlu0 %v278, 120
    %v287 = vpop.permute.xlu0 %286
    %v292 = vadd.f32 %v251, %v281
    %v293 = vadd.f32 %v256, %v283
    %v294 = vadd.f32 %v261, %v285
    %v295 = vadd.f32 %v266, %v287
    %vm296 = vcmask 64512
    %v297 = vsel %vm296, %v292, -inf
    %vm298 = vcmask 63488
    %v299 = vsel %vm298, %v293, -inf
    %v300 = vmax.f32 %v297, %v299
    %v301 = vrot.slane %v300, 4
    %v302 = vmax.f32 %v300, %v301
    %v303 = vrot.slane %v302, 2
    %v304 = vmax.f32 %v302, %v303
    %v305 = vrot.slane %v304, 1
    %v306 = vmax.f32 %v304, %v305
    %v307 = vsel %vm296, %v294, -inf
    %v308 = vsel %vm298, %v295, -inf
    %v309 = vmax.f32 %v307, %v308
    %v310 = vrot.slane %v309, 4
    %v311 = vmax.f32 %v309, %v310
    %v312 = vrot.slane %v311, 2
    %v313 = vmax.f32 %v311, %v312
    %v314 = vrot.slane %v313, 1
    %v315 = vmax.f32 %v313, %v314
    %vm316 = vcmask 1045504
    %v317 = vrot.slane %v251, 2
    %v318 = vrot.slane %v256, 2
    %v319 = vsel %vm316, %v317, %v318
    %v320 = vrot.slane %v261, 2
    %v321 = vrot.slane %v266, 2
    %v322 = vsel %vm316, %v320, %v321
    %323 = vrot.lane.b32.xlu0 %v319, 112
    %v324 = vpop.permute.xlu0 %323
    %325 = vrot.lane.b32.xlu0 %v318, 112
    %v326 = vpop.permute.xlu0 %325
    %327 = vrot.lane.b32.xlu0 %v322, 112
    %v328 = vpop.permute.xlu0 %327
    %329 = vrot.lane.b32.xlu0 %v321, 112
    %v330 = vpop.permute.xlu0 %329
    %v335 = vadd.f32 %v292, %v324
    %v336 = vadd.f32 %v293, %v326
    %v337 = vadd.f32 %v294, %v328
    %v338 = vadd.f32 %v295, %v330
    %vm339 = vcmask 195712
    %v340 = vsel %vm339, %v335, -inf
    %vm341 = vcmask 193664
    %v342 = vsel %vm341, %v336, -inf
    %v343 = vmax.f32 %v340, %v342
    %v344 = vrot.slane %v343, 4
    %v345 = vmax.f32 %v343, %v344
    %v346 = vrot.slane %v345, 2
    %v347 = vmax.f32 %v345, %v346
    %v348 = vrot.slane %v347, 1
    %v349 = vmax.f32 %v347, %v348
    %v350 = vsel %vm339, %v337, -inf
    %v351 = vsel %vm341, %v338, -inf
    %v352 = vmax.f32 %v350, %v351
    %v353 = vrot.slane %v352, 4
    %v354 = vmax.f32 %v352, %v353
    %v355 = vrot.slane %v354, 2
    %v356 = vmax.f32 %v354, %v355
    %v357 = vrot.slane %v356, 1
    %v358 = vmax.f32 %v356, %v357
    %vm359 = vcmask 1044480
    %v360 = vrot.slane %v251, 3
    %v361 = vrot.slane %v256, 3
    %v362 = vsel %vm359, %v360, %v361
    %v363 = vrot.slane %v261, 3
    %v364 = vrot.slane %v266, 3
    %v365 = vsel %vm359, %v363, %v364
    %366 = vrot.lane.b32.xlu0 %v362, 104
    %v367 = vpop.permute.xlu0 %366
    %368 = vrot.lane.b32.xlu0 %v361, 104
    %v369 = vpop.permute.xlu0 %368
    %370 = vrot.lane.b32.xlu0 %v365, 104
    %v371 = vpop.permute.xlu0 %370
    %372 = vrot.lane.b32.xlu0 %v364, 104
    %v373 = vpop.permute.xlu0 %372
    %v378 = vadd.f32 %v335, %v367
    %v379 = vadd.f32 %v336, %v369
    %v380 = vadd.f32 %v337, %v371
    %v381 = vadd.f32 %v338, %v373
    %vm382 = vcmask 392512
    %v383 = vsel %vm382, %v378, -inf
    %vm384 = vcmask 389440
    %v385 = vsel %vm384, %v379, -inf
    %v386 = vmax.f32 %v383, %v385
    %v387 = vrot.slane %v386, 4
    %v388 = vmax.f32 %v386, %v387
    %v389 = vrot.slane %v388, 2
    %v390 = vmax.f32 %v388, %v389
    %v391 = vrot.slane %v390, 1
    %v392 = vmax.f32 %v390, %v391
    %v393 = vsel %vm382, %v380, -inf
    %v394 = vsel %vm384, %v381, -inf
    %v395 = vmax.f32 %v393, %v394
    %v396 = vrot.slane %v395, 4
    %v397 = vmax.f32 %v395, %v396
    %v398 = vrot.slane %v397, 2
    %v399 = vmax.f32 %v397, %v398
    %v400 = vrot.slane %v399, 1
    %v401 = vmax.f32 %v399, %v400
    %vm404 = vcmask 1041409
    %v405 = vsel %vm404, %v315, %v306
    %v409 = vsel %vm404, %v358, %v349
    %410 = vrot.lane.b32.xlu0 %v409, 120
    %v411 = vpop.permute.xlu0 %410
    %v415 = vsel %vm404, %v401, %v392
    %416 = vrot.lane.b32.xlu0 %v415, 104
    %v417 = vpop.permute.xlu0 %416
    %v419 = vsel %vm296, %v405, %v411
    %vm420 = vcmask 130048
    %v421 = vsel %vm420, %v419, %v417
    %v422 = vld [vmem:[%s3] sm:$0x1]
    %v424 = vlaneseq
    %v425 = vshrl.u32 %v424, 7
    %v426 = vsub.s32 0, %v425
    %v427 = vrot.slane %v422, %v426
    %v429 = vadd.f32 %v421, %v427
    %v430 = vmax.f32 %v429, 0.0
    %v431 = vld [vmem:[%s4] sm:$0xff]
    %v432 = vld [vmem:[%s4 + $0x8] sm:$0xff]
    %v433 = vld [vmem:[%s4 + $0x10] sm:$0xff]
    %v434 = vld [vmem:[#allocation2] sm:$0x1]
    %v436 = vlaneseq
    %v437 = vshrl.u32 %v436, 7
    %v438 = vsub.s32 0, %v437
    %v439 = vrot.slane %v434, %v438
    %vm441 = vcmask 195584
    %v443 = vsel %vm441, %v430, 0
    %445 = vmatprep.subr.mxu0 0.0
    %446 = vmatpush1.msra.mxu0 0.0
    %447 = vmatprep.subr.mxu0 0.0
    %448 = vmatpush1.msra.mxu0 0.0
    %449 = vmatprep.subr.mxu0 0.0
    %450 = vmatpush1.msra.mxu0 0.0
    %451 = vmatprep.subr.mxu0 0.0
    %452 = vmatpush1.msra.mxu0 0.0
    %453 = vmatprep.subr.mxu0 0.0
    %454 = vmatpush1.msra.mxu0 0.0
    %455 = vmatprep.subr.mxu0 0.0
    %456 = vmatpush1.msra.mxu0 0.0
    %457 = vmatprep.subr.mxu0 0.0
    %458 = vmatpush1.msra.mxu0 0.0
    %459 = vmatprep.subr.mxu0 0.0
    %460 = vmatpush1.msra.mxu0 0.0
    %461 = vmatprep.subr.mxu0 0.0
    %462 = vmatpush1.msra.mxu0 0.0
    %463 = vmatprep.subr.mxu0 0.0
    %464 = vmatpush1.msra.mxu0 0.0
    %465 = vmatprep.subr.mxu0 0.0
    %466 = vmatpush1.msra.mxu0 0.0
    %467 = vmatprep.subr.mxu0 0.0
    %468 = vmatpush1.msra.mxu0 0.0
    %469 = vmatprep.subr.mxu0 0.0
    %470 = vmatpush1.msra.mxu0 0.0
    %471 = vmatprep.subr.mxu0 0.0
    %472 = vmatpush1.msra.mxu0 %v433
    %473 = vmatprep.subr.mxu0 0.0
    %474 = vmatpush1.msra.mxu0 %v432
    %475 = vmatprep.subr.mxu0 0.0
    %476 = vmatpush1.msra.mxu0 %v431
    %477 = vmatprep.subr.mxu0 0.0
    %478 = vmatpush2.msra.mxu0 0.0
    %479 = vmatprep.subr.mxu0 0.0
    %480 = vmatpush2.msra.mxu0 0.0
    %481 = vmatprep.subr.mxu0 0.0
    %482 = vmatpush2.msra.mxu0 0.0
    %483 = vmatprep.subr.mxu0 0.0
    %484 = vmatpush2.msra.mxu0 0.0
    %485 = vmatprep.subr.mxu0 0.0
    %486 = vmatpush2.msra.mxu0 0.0
    %487 = vmatprep.subr.mxu0 0.0
    %488 = vmatpush2.msra.mxu0 0.0
    %489 = vmatprep.subr.mxu0 0.0
    %490 = vmatpush2.msra.mxu0 0.0
    %491 = vmatprep.subr.mxu0 0.0
    %492 = vmatpush2.msra.mxu0 0.0
    %493 = vmatprep.subr.mxu0 0.0
    %494 = vmatpush2.msra.mxu0 0.0
    %495 = vmatprep.subr.mxu0 0.0
    %496 = vmatpush2.msra.mxu0 0.0
    %497 = vmatprep.subr.mxu0 0.0
    %498 = vmatpush2.msra.mxu0 0.0
    %499 = vmatprep.subr.mxu0 0.0
    %500 = vmatpush2.msra.mxu0 0.0
    %501 = vmatprep.subr.mxu0 0.0
    %502 = vmatpush2.msra.mxu0 0.0
    %503 = vmatprep.subr.mxu0 0.0
    %504 = vmatpush2.msra.mxu0 0.0
    %505 = vmatprep.subr.mxu0 0.0
    %506 = vmatpush2.msra.mxu0 0.0
    %507 = vmatprep.subr.mxu0 0.0
    %508 = vmatpush2.msra.mxu0 0.0
    %509 = vmatprep.mubr.f32.mxu0 0.0
    %510 = vmatmul.mubr.f32.gmra.mxu0 %v443
    %v511 = vpop.f32.mrf.mxu0
    %v512 = vadd.f32 %v439, %v511
    %v513 = vpop.f32.mrf.mxu0
    %514 = vdwg.mxu0
    %vm515 = vcmask 25600
    %516 = vst.msk [vmem:[#allocation5] sm:$0x3] %vm515, %v512
    // Predicated region
    $region30: #{textcnn_forward.1} parent=1 // pred_check
      _
    $region31: #{textcnn_forward.1} parent=1 // pred_check_branch
      %518 = sbr.rel (0) target = $region33
    $region32: #{textcnn_forward.1} parent=1 // pred_region
      %s520 = ssub.s32 32, 32
      %521 = vsyncadd [#allocation4], %s520
      %s523 = sshll.u32 [#allocation5], 4
      %s524 = int_to_ptr.vmem [resolvable:$true] %s523
      %526 = dma.vmem_to_hbm [thread:$0]  %s524, 32, %s6, [#allocation4]
    $region33: #{textcnn_forward.1} parent=1 // pred_fallthru
      _
    // Predicated region
    $region34: #{textcnn_forward.1} parent=1 // pred_check
      _
    $region35: #{textcnn_forward.1} parent=1 // pred_check_branch
      %528 = sbr.rel (0) target = $region37
    $region36: #{textcnn_forward.1} parent=1 // pred_region
      %529 = dma.done [#allocation4], 32
    $region37: #{textcnn_forward.1} parent=1 // pred_fallthru
      _
    %530 = vsyncpa [#allocation3], 1
    %531 = vsyncpa [#allocation4], 1

</llo_original>
